<compile_context>
chip_gen: v5e
topology: v5e:2x2
jax: 0.10.0
libtpu: 0.0.40
codegen_flags: <defaults>
</compile_context>

<pallas_src>
import numpy as np
import jax
import jax.numpy as jnp
from jax import lax
from jax.experimental import pallas as pl
from jax.experimental.pallas import tpu as pltpu


# ----------------------------------------------------------------------------
# Kernel
# ----------------------------------------------------------------------------
def rope_kernel(x_ref, cos_ref, sin_ref, o_ref):
    """One (tb, ts, D) tile.

    out = x * cos + x_swapped * sin_signed
    x_swapped[..., i] = x[..., i+1] at even lanes, x[..., i-1] at odd lanes.
    sin_signed carries the rotate_half sign (negative at even lanes), so the
    circular wraparound of the two lane rolls (lane D-1 for x_next, lane 0 for
    x_prev) is discarded by the parity select and never contributes.
    """
    x = x_ref[...].astype(jnp.float32)                       # (tb, ts, D)
    last = x.ndim - 1
    d = x.shape[-1]
    x_next = pltpu.roll(x, d - 1, axis=last)                 # x_next[i] = x[i+1 mod d]
    x_prev = pltpu.roll(x, 1, axis=last)                     # x_prev[i] = x[i-1 mod d]
    lane = lax.broadcasted_iota(jnp.int32, x.shape, last)
    x_swapped = jnp.where((lane & 1) == 0, x_next, x_prev)
    out = (x * cos_ref[...].astype(jnp.float32)
           + x_swapped * sin_ref[...].astype(jnp.float32))
    o_ref[...] = out.astype(o_ref.dtype)


# ----------------------------------------------------------------------------
# Fixed buffers (register_buffer equivalents)
# ----------------------------------------------------------------------------
def make_rope_tables(d_model, max_len, table_dtype=jnp.float32):
    """cos_full (max_len, D) and sin_signed (max_len, D).

    sin_signed folds the repeat_interleave AND the rotate_half sign:
        sin_signed[p, 2k]   = -sin(p * inv_freq[k])
        sin_signed[p, 2k+1] = +sin(p * inv_freq[k])
    INVARIANT the kernel relies on: even lanes multiply x[i+1], odd lanes
    multiply x[i-1]; the parity select in the kernel must stay in sync with
    this sign layout (it also neutralizes the roll wraparound at lanes 0/D-1).
    """
    assert d_model % 2 == 0, "d_model must be even for ROPE."
    inv_freq = 1.0 / (10000.0 ** (np.arange(0, d_model, 2, dtype=np.float32)
                                  / d_model))
    positions = np.arange(0, max_len, dtype=np.float32)
    sinusoid = positions[:, None] * inv_freq[None, :]               # (L, D//2)
    sin_full = np.repeat(np.sin(sinusoid), 2, axis=-1)              # (L, D)
    cos_full = np.repeat(np.cos(sinusoid), 2, axis=-1)              # (L, D)
    even = (np.arange(d_model) % 2) == 0
    sin_signed = np.where(even, -sin_full, sin_full)
    return (jnp.asarray(cos_full, dtype=table_dtype),
            jnp.asarray(sin_signed, dtype=table_dtype))


# ----------------------------------------------------------------------------
# Tiling heuristics
# ----------------------------------------------------------------------------
def _vmem_budget_and_limit():
    """Conservative (v7x-safe) defaults; scale up on 128 MiB-VMEM chips."""
    budget, limit = 24 << 20, 32 << 20
    try:
        info = pltpu.get_tpu_info()
        cap = getattr(info, "vmem_capacity_bytes", None)
        if cap is not None and cap >= (100 << 20):   # v5e / v6e (128 MiB)
            budget, limit = 48 << 20, 64 << 20
    except Exception:
        pass
    return budget, limit


def _choose_tiles(B, S, D, x_itemsize, tbl_itemsize, vmem_budget):
    """Pick (seq_tile, batch_tile). seq_tile divides S (or equals S),
    batch_tile divides B. Targets >=~1 MiB per x tile (HBM-roofline plateau)
    while keeping the double-buffered x/out/cos/sin working set under budget,
    and keeps >=2 grid steps when possible (v7x has 2 TensorCores)."""
    pack = max(8, 32 // max(x_itemsize, 1))          # sublane multiple for dtype
    budget = (vmem_budget * 2) // 3                  # headroom for f32 temps
    per_row = 4 * D * (x_itemsize + tbl_itemsize)    # dbl-buffered x,out,cos,sin

    # Sequence tile.
    if S <= pack or S % pack != 0:
        ts = S                                       # full-extent fallback
    else:
        max_rows = max(pack, budget // per_row)
        ts = min(S, (max_rows // pack) * pack)
        while S % ts != 0:                           # terminates at pack | S
            ts -= pack
    num_s = S // ts

    # Batch tile: only widen for decode-like shapes (whole S fits one tile and
    # the x tile is still small), staying under budget.
    tb = 1
    target_bytes = 1 << 20
    if num_s == 1 and B > 1:
        for cand in range(2, B + 1):
            if B % cand != 0:
                continue
            step_bytes = 4 * cand * ts * D * x_itemsize + 4 * ts * D * tbl_itemsize
            if step_bytes > budget:
                break
            tb = cand
            if cand * ts * D * x_itemsize >= target_bytes:
                break
        if tb == B:                                  # keep >=2 grid steps
            tb = max(d for d in range(1, B) if B % d == 0)
    return ts, tb


# ----------------------------------------------------------------------------
# Wrapper
# ----------------------------------------------------------------------------
def rope_forward(x, cos_full, sin_signed, *, seq_tile=None, batch_tile=None):
    """x: (B, S, D) -> (B, S, D). cos_full / sin_signed are the full
    (max_len, D) fixed buffers from make_rope_tables (passed un-sliced; the
    BlockSpec index_map selects the rows, no extra XLA copies)."""
    B, S, D = x.shape
    assert D % 2 == 0
    assert cos_full.shape == sin_signed.shape
    assert cos_full.shape[0] >= S and cos_full.shape[1] == D
    # TODO(synk): D not a multiple of 128 would hit masked partial stores; pad
    # in the caller if that ever happens (not validated here beyond the assert).

    vmem_budget, vmem_limit = _vmem_budget_and_limit()
    ts_auto, tb_auto = _choose_tiles(B, S, D, x.dtype.itemsize,
                                     cos_full.dtype.itemsize, vmem_budget)
    ts = seq_tile if seq_tile is not None else ts_auto
    tb = batch_tile if batch_tile is not None else tb_auto
    assert S % ts == 0 and (ts == S or ts % 8 == 0), "bad seq tile"
    assert B % tb == 0, "bad batch tile"

    # Batch innermost: the table block index only depends on the outer (seq)
    # axis, so each table tile stays resident across the whole batch loop.
    grid = (S // ts, B // tb)

    x_spec = pl.BlockSpec((tb, ts, D), lambda s, b: (b, s, 0))
    out_spec = pl.BlockSpec((tb, ts, D), lambda s, b: (b, s, 0))
    tbl_spec = pl.BlockSpec((ts, D), lambda s, b: (s, 0))

    cost = pl.CostEstimate(
        flops=5 * B * S * D,
        transcendentals=0,
        bytes_accessed=2 * B * S * D * x.dtype.itemsize
                       + 2 * S * D * cos_full.dtype.itemsize,
    )

    return pl.pallas_call(
        rope_kernel,
        out_shape=jax.ShapeDtypeStruct((B, S, D), x.dtype),
        grid_spec=pltpu.PrefetchScalarGridSpec(
            num_scalar_prefetch=0,
            grid=grid,
            in_specs=[x_spec, tbl_spec, tbl_spec],
            out_specs=out_spec,
        ),
        compiler_params=pltpu.CompilerParams(
            dimension_semantics=("parallel", "parallel"),
            vmem_limit_bytes=vmem_limit,
        ),
        cost_estimate=cost,
    )(x, cos_full, sin_signed)


# ----------------------------------------------------------------------------
# Pure-JAX reference (replica of the PyTorch forward)
# ----------------------------------------------------------------------------
def rope_reference(x, d_model, max_len):
    B, S, D = x.shape
    inv_freq = 1.0 / (10000.0 ** (jnp.arange(0, d_model, 2, dtype=jnp.float32)
                                  / d_model))
    positions = jnp.arange(0, max_len, dtype=jnp.float32)
    sinusoid = positions[:, None] * inv_freq[None, :]
    sin_full = jnp.repeat(jnp.sin(sinusoid)[:S], 2, axis=-1)[None]
    cos_full = jnp.repeat(jnp.cos(sinusoid)[:S], 2, axis=-1)[None]
    x_even = -x[..., 1::2]
    x_odd = x[..., 0::2]
    rot = jnp.stack([x_even, x_odd], axis=-1).reshape(B, S, D)
    return x * cos_full + rot * sin_full


if __name__ == "__main__":
    # Small, hardware-aligned demo shapes: D lane-dense (multiple of 128),
    # S a multiple of the packing sublane size.
    batch, seq_len, d_model, max_len = 2, 64, 128, 128

    key = jax.random.PRNGKey(0)
    x = jax.random.normal(key, (batch, seq_len, d_model), dtype=jnp.float32)

    cos_full, sin_signed = make_rope_tables(d_model, max_len)
    ref = jax.block_until_ready(rope_reference(x, d_model, max_len))

    # 1) Auto-chosen tiling.
    out = jax.block_until_ready(rope_forward(x, cos_full, sin_signed))
    assert out.shape == (batch, seq_len, d_model)
    assert np.allclose(np.asarray(out), np.asarray(ref), atol=1e-5, rtol=1e-5)

    # 2) Forced multi-tile sequence grid (exercises the pipelined path).
    out2 = jax.block_until_ready(
        rope_forward(x, cos_full, sin_signed, seq_tile=16))
    assert np.allclose(np.asarray(out2), np.asarray(ref), atol=1e-5, rtol=1e-5)

    # 3) Batch-tiled (decode-like) path: one (tb, S, D) block per grid step.
    out3 = jax.block_until_ready(
        rope_forward(x, cos_full, sin_signed, seq_tile=seq_len, batch_tile=2))
    assert np.allclose(np.asarray(out3), np.asarray(ref), atol=1e-5, rtol=1e-5)

    # 4) bf16 I/O path (compute stays f32 inside the kernel).
    x_bf = x.astype(jnp.bfloat16)
    ref_bf = jax.block_until_ready(
        rope_reference(x_bf.astype(jnp.float32), d_model, max_len))
    out_bf = jax.block_until_ready(
        rope_forward(x_bf, cos_full, sin_signed, seq_tile=16))
    assert out_bf.dtype == jnp.bfloat16
    assert np.allclose(np.asarray(out_bf, dtype=np.float32),
                       np.asarray(ref_bf), atol=1e-2, rtol=1e-2)

    print("KERNEL_OK")
</pallas_src>

<mosaic_0001>
module attributes {stable_mosaic.version = 11 : i64} {
  func.func @rope_kernel(%arg0: i32, %arg1: i32, %arg2: memref<1x64x128xf32, #tpu.memory_space<vmem>>, %arg3: memref<64x128xf32, #tpu.memory_space<vmem>>, %arg4: memref<64x128xf32, #tpu.memory_space<vmem>>, %arg5: memref<1x64x128xf32, #tpu.memory_space<vmem>>) attributes {dimension_semantics = [#tpu.dimension_semantics<parallel>, #tpu.dimension_semantics<parallel>], iteration_bounds = array<i64: 1, 2>, scalar_prefetch = 0 : i64, scratch_operands = 0 : i64, tpu.core_type = #tpu.core_type<tc>, window_params = [{transform_indices = @transform_0, window_bounds = array<i64: 1, 64, 128>}, {transform_indices = @transform_1, window_bounds = array<i64: 64, 128>}, {transform_indices = @transform_2, window_bounds = array<i64: 64, 128>}, {transform_indices = @transform_3, window_bounds = array<i64: 1, 64, 128>}]} {
    %c0 = arith.constant 0 : index
    %c0_0 = arith.constant 0 : index
    %c0_1 = arith.constant 0 : index
    %0 = vector.load %arg2[%c0, %c0_0, %c0_1] : memref<1x64x128xf32, #tpu.memory_space<vmem>>, vector<1x64x128xf32>
    %c127_i32 = arith.constant 127 : i32
    %1 = tpu.dynamic_rotate %0 by %c127_i32 dim 2 : vector<1x64x128xf32>, i32 -> vector<1x64x128xf32>
    %c1_i32 = arith.constant 1 : i32
    %2 = tpu.dynamic_rotate %0 by %c1_i32 dim 2 : vector<1x64x128xf32>, i32 -> vector<1x64x128xf32>
    %3 = tpu.iota {dimensions = array<i32: 2>} : vector<1x64x128xi32>
    %c1_i32_2 = arith.constant 1 : i32
    %4 = vector.broadcast %c1_i32_2 : i32 to vector<1x64x128xi32>
    %5 = arith.andi %3, %4 : vector<1x64x128xi32>
    %c0_i32 = arith.constant 0 : i32
    %6 = vector.broadcast %c0_i32 : i32 to vector<1x64x128xi32>
    %7 = arith.cmpi eq, %5, %6 : vector<1x64x128xi32>
    %8 = arith.select %7, %1, %2 : vector<1x64x128xi1>, vector<1x64x128xf32>
    %c0_3 = arith.constant 0 : index
    %c0_4 = arith.constant 0 : index
    %9 = vector.load %arg3[%c0_3, %c0_4] : memref<64x128xf32, #tpu.memory_space<vmem>>, vector<64x128xf32>
    %10 = vector.shape_cast %9 : vector<64x128xf32> to vector<1x64x128xf32>
    %11 = arith.mulf %0, %10 : vector<1x64x128xf32>
    %c0_5 = arith.constant 0 : index
    %c0_6 = arith.constant 0 : index
    %12 = vector.load %arg4[%c0_5, %c0_6] : memref<64x128xf32, #tpu.memory_space<vmem>>, vector<64x128xf32>
    %13 = vector.shape_cast %12 : vector<64x128xf32> to vector<1x64x128xf32>
    %14 = arith.mulf %8, %13 : vector<1x64x128xf32>
    %15 = arith.addf %11, %14 : vector<1x64x128xf32>
    %c0_7 = arith.constant 0 : index
    %c0_8 = arith.constant 0 : index
    %c0_9 = arith.constant 0 : index
    %16 = vector.load %arg5[%c0_7, %c0_8, %c0_9] : memref<1x64x128xf32, #tpu.memory_space<vmem>>, vector<1x64x128xf32>
    tpu.vector_store %arg5[%c0_7, %c0_8, %c0_9], %15 {strides = array<i32>} : memref<1x64x128xf32, #tpu.memory_space<vmem>>, vector<1x64x128xf32>,
    return
  }
  func.func @transform_0(%arg0: i32, %arg1: i32) -> (i32, i32, i32) {
    %c0_i32 = arith.constant 0 : i32
    %c0_i32_0 = arith.constant 0 : i32
    return %arg1, %arg0, %c0_i32 : i32, i32, i32
  }
  func.func @transform_1(%arg0: i32, %arg1: i32) -> (i32, i32) {
    %c0_i32 = arith.constant 0 : i32
    %c0_i32_0 = arith.constant 0 : i32
    return %arg0, %c0_i32 : i32, i32
  }
  func.func @transform_2(%arg0: i32, %arg1: i32) -> (i32, i32) {
    %c0_i32 = arith.constant 0 : i32
    %c0_i32_0 = arith.constant 0 : i32
    return %arg0, %c0_i32 : i32, i32
  }
  func.func @transform_3(%arg0: i32, %arg1: i32) -> (i32, i32, i32) {
    %c0_i32 = arith.constant 0 : i32
    %c0_i32_0 = arith.constant 0 : i32
    return %arg1, %arg0, %c0_i32 : i32, i32, i32
  }
}

</mosaic_0001>

<llo_original>
// kernel: tpu_custom_call.1
$region0: #{tpu_custom_call.1}
  #allocation0 [shape = 'u32[]', space=smem, size = 0x4, offset = 0x4, fixed_abs, tag = 'smem constant byte address 0x4 - core index']
  #allocation1 [shape = 'u32[72,128]{1,0:T(1,128)}', space=vmem, size = 0x9000, scoped, tag = 'internal scratch']
  %s0 = inlined_call_operand.hbm [shape: f32[2,64,128], index: 0, kind: input, shape index: {}]
  %s1 = inlined_call_operand.hbm [shape: f32[128,128], index: 1, kind: input, shape index: {}]
  %s2 = inlined_call_operand.hbm [shape: f32[128,128], index: 2, kind: input, shape index: {}]
  %s3 = inlined_call_operand.hbm [shape: f32[2,64,128], index: 3, kind: output, shape index: {}]
  %s4 = sld [smem:[#allocation0]]
  $region57: #{tpu_custom_call.1} parent=0
    _
  %s6 = ssub.s32 1, %s4
  %s7 = scalar_select 0, %s6, %s4
  $region1: #{tpu_custom_call.1} parent=0
    #allocation2 [shape = 'u8[65536]{0}', space=vmem, size = 0x10000, scoped, tag = 'input window, operand 0']
    #allocation3 [shape = 's32[2]{0}', space=sflag, size = 0x8, scoped, tag = 'scoped memory for tpu_custom_call.1']
    #allocation4 [shape = 's32[2]{0}', space=sflag, size = 0x8, scoped, tag = 'scoped memory for tpu_custom_call.1']
    #allocation5 [shape = 'u8[32768]{0}', space=vmem, size = 0x8000, scoped, tag = 'input window, operand 1, single buffered']
    #allocation6 [shape = 's32[1]{0}', space=sflag, size = 0x4, scoped, tag = 'scoped memory for tpu_custom_call.1']
    #allocation7 [shape = 'u8[32768]{0}', space=vmem, size = 0x8000, scoped, tag = 'input window, operand 2, single buffered']
    #allocation8 [shape = 'u8[65536]{0}', space=vmem, size = 0x10000, scoped, tag = 'output window, operand 0']
    %8 = vsyncpa [#allocation3], 0
    %s9 = scalar_lea.sflag [#allocation3], 1
    %10 = vsyncpa %s9, 0
    %11 = vsyncpa [#allocation6], 0
    %12 = vsyncpa [#allocation4], 0
    %s13 = scalar_lea.sflag [#allocation4], 1
    %14 = vsyncpa %s13, 0
    loop: start=0, step=1, limit=4
    $region2: #{tpu_custom_call.1} parent=1 // loop_pre_header
      _
    $region3: #{tpu_custom_call.1} parent=1 // loop_header
      %s16 = sphi 0, %s20
      %p17 = scmp.ge.s32.totalorder %s16, 4
      %s23 = sphi 0, %s35
      %s24 = sphi 0, %s31
      %s25 = sphi 0, %s23
      %s26 = sphi 0, %s24
      %s27 = sphi 0, %s25
      %s28 = sphi 0, %s26
      %s40 = sphi 0, %s42
      %s43 = sphi 0, %s40
      %s44 = sphi 0, %s43
      %s60 = sphi 0, %s44
      %s66 = sphi 0, %s68
      %s69 = sphi 0, %s66
      %s70 = sphi 0, %s69
      %s86 = sphi 0, %s70
      %s92 = sphi 0, %s94
      %s95 = sphi 0, %s92
      %s96 = sphi 0, %s95
      %s112 = sphi 0, %s96
      %s120 = sphi 0, %s122
      %s123 = sphi 0, %s120
      %s124 = sphi 0, %s123
      %s140 = sphi 0, %s124
    $region4: #{tpu_custom_call.1} parent=1 // loop_header_branch
      %19 = sbr.rel (%p17) target = $region8
    $region5: #{tpu_custom_call.1} parent=1 // loop_body
      %s21 = ssub.s32 %s16, 1
      %s22 = ssub.s32 %s16, 2
      %s29 = sadd.s32 1, %s24
      %p30 = scmp.ge.s32.totalorder %s29, 2
      %s31 = scalar_select %p30, 0, %s29
      %s32 = sadd.s32 1, %s23
      %s33 = scalar_select %p30, %s32, %s23
      %p34 = scmp.ge.s32.totalorder %s33, 1
      %s35 = scalar_select %p34, 0, %s33
      %s36 = ssub.s32 %s24, %s31
      %s37 = ssub.s32 %s23, %s35
      %s38 = sor.u32 %s36, %s37
      %p39 = scmp.eq.s32.totalorder %s38, 0
      %s41 = sadd.s32 %s40, 1
      %s42 = scalar_select %p39, %s40, %s41
      %p45 = pneg %p39
      %p46 = scmp.eq.s32.totalorder %s16, 1
      %p47 = por %p45, %p46
      %p48 = scmp.ne.s32.totalorder %s40, %s43
      %p49 = scmp.eq.s32.totalorder %s16, 0
      %p50 = por %p48, %p49
      %p51 = scmp.ne.s32.totalorder %s40, %s43
      %p52 = scmp.eq.s32.totalorder %s21, 1
      %p53 = por %p51, %p52
      %p54 = scmp.ne.s32.totalorder %s43, %s44
      %p55 = scmp.eq.s32.totalorder %s21, 0
      %p56 = por %p54, %p55
      %p57 = scmp.ne.s32.totalorder %s43, %s44
      %p58 = scmp.eq.s32.totalorder %s22, 1
      %p59 = por %p57, %p58
      %p61 = scmp.ne.s32.totalorder %s44, %s60
      %p62 = scmp.eq.s32.totalorder %s22, 0
      %p63 = por %p61, %p62
      %s64 = ssub.s32 %s23, %s35
      %p65 = scmp.eq.s32.totalorder %s64, 0
      %s67 = sadd.s32 %s66, 1
      %s68 = scalar_select %p65, %s66, %s67
      %p71 = pneg %p65
      %p72 = scmp.eq.s32.totalorder %s16, 1
      %p73 = por %p71, %p72
      %p74 = scmp.ne.s32.totalorder %s66, %s69
      %p75 = scmp.eq.s32.totalorder %s16, 0
      %p76 = por %p74, %p75
      %p77 = scmp.ne.s32.totalorder %s66, %s69
      %p78 = scmp.eq.s32.totalorder %s21, 1
      %p79 = por %p77, %p78
      %p80 = scmp.ne.s32.totalorder %s69, %s70
      %p81 = scmp.eq.s32.totalorder %s21, 0
      %p82 = por %p80, %p81
      %p83 = scmp.ne.s32.totalorder %s69, %s70
      %p84 = scmp.eq.s32.totalorder %s22, 1
      %p85 = por %p83, %p84
      %p87 = scmp.ne.s32.totalorder %s70, %s86
      %p88 = scmp.eq.s32.totalorder %s22, 0
      %p89 = por %p87, %p88
      %s90 = ssub.s32 %s23, %s35
      %p91 = scmp.eq.s32.totalorder %s90, 0
      %s93 = sadd.s32 %s92, 1
      %s94 = scalar_select %p91, %s92, %s93
      %p97 = pneg %p91
      %p98 = scmp.eq.s32.totalorder %s16, 1
      %p99 = por %p97, %p98
      %p100 = scmp.ne.s32.totalorder %s92, %s95
      %p101 = scmp.eq.s32.totalorder %s16, 0
      %p102 = por %p100, %p101
      %p103 = scmp.ne.s32.totalorder %s92, %s95
      %p104 = scmp.eq.s32.totalorder %s21, 1
      %p105 = por %p103, %p104
      %p106 = scmp.ne.s32.totalorder %s95, %s96
      %p107 = scmp.eq.s32.totalorder %s21, 0
      %p108 = por %p106, %p107
      %p109 = scmp.ne.s32.totalorder %s95, %s96
      %p110 = scmp.eq.s32.totalorder %s22, 1
      %p111 = por %p109, %p110
      %p113 = scmp.ne.s32.totalorder %s96, %s112
      %p114 = scmp.eq.s32.totalorder %s22, 0
      %p115 = por %p113, %p114
      %s116 = ssub.s32 %s24, %s31
      %s117 = ssub.s32 %s23, %s35
      %s118 = sor.u32 %s116, %s117
      %p119 = scmp.eq.s32.totalorder %s118, 0
      %s121 = sadd.s32 %s120, 1
      %s122 = scalar_select %p119, %s120, %s121
      %p125 = pneg %p119
      %p126 = scmp.eq.s32.totalorder %s16, 1
      %p127 = por %p125, %p126
      %p128 = scmp.ne.s32.totalorder %s120, %s123
      %p129 = scmp.eq.s32.totalorder %s16, 0
      %p130 = por %p128, %p129
      %p131 = scmp.ne.s32.totalorder %s120, %s123
      %p132 = scmp.eq.s32.totalorder %s21, 1
      %p133 = por %p131, %p132
      %p134 = scmp.ne.s32.totalorder %s123, %s124
      %p135 = scmp.eq.s32.totalorder %s21, 0
      %p136 = por %p134, %p135
      %p137 = scmp.ne.s32.totalorder %s123, %s124
      %p138 = scmp.eq.s32.totalorder %s22, 1
      %p139 = por %p137, %p138
      %p141 = scmp.ne.s32.totalorder %s124, %s140
      %p142 = scmp.eq.s32.totalorder %s22, 0
      %p143 = por %p141, %p142
      %p144 = scmp.le.s32.totalorder 1, %s16
      %p145 = scmp.lt.s32.totalorder %s16, 3
      %p146 = pnand %p144, %p145
      %p147 = pneg %p146
      // Predicated region
      $region9: #{tpu_custom_call.1} parent=5 // pred_check
        _
      $region10: #{tpu_custom_call.1} parent=5 // pred_check_branch
        %149 = sbr.rel (%p146) target = $region12
      $region11: #{tpu_custom_call.1} parent=5 // pred_region
        %s150 = ssub.s32 %s16, 1
        // Predicated region
        $region13: #{tpu_custom_call.1} parent=11 // pred_check
          %p151 = pneg %p82
        $region14: #{tpu_custom_call.1} parent=11 // pred_check_branch
          %153 = sbr.rel (%p151) target = $region16
        $region15: #{tpu_custom_call.1} parent=11 // pred_region
          %s154 = smul.u32 8, %s25
          %156 = vsyncadd [#allocation6], 0
          %s157 = smul.addr %s154, 8
          %s158 = scalar_lea.hbm %s1, %s157
          %s159 = sshll.u32 %s158, 4
          %s160 = int_to_ptr.hbm [resolvable:$true] %s159
          %s161 = sshll.u32 [#allocation5], 4
          %s162 = int_to_ptr.vmem [resolvable:$true] %s161
          %167 = dma.hbm_to_vmem [thread:$0]  %s160, 1024, %s162, [#allocation6], 128, 128, 8
        $region16: #{tpu_custom_call.1} parent=11 // pred_fallthru
          _
        // Predicated region
        $region17: #{tpu_custom_call.1} parent=11 // pred_check
          %p168 = pneg %p108
        $region18: #{tpu_custom_call.1} parent=11 // pred_check_branch
          %170 = sbr.rel (%p168) target = $region20
        $region19: #{tpu_custom_call.1} parent=11 // pred_region
          %s171 = smul.u32 8, %s25
          %173 = vsyncadd [#allocation6], 0
          %s174 = smul.addr %s171, 8
          %s175 = scalar_lea.hbm %s2, %s174
          %s176 = sshll.u32 %s175, 4
          %s177 = int_to_ptr.hbm [resolvable:$true] %s176
          %s178 = sshll.u32 [#allocation7], 4
          %s179 = int_to_ptr.vmem [resolvable:$true] %s178
          %184 = dma.hbm_to_vmem [thread:$0]  %s177, 1024, %s179, [#allocation6], 128, 128, 8
        $region20: #{tpu_custom_call.1} parent=11 // pred_fallthru
          _
      $region12: #{tpu_custom_call.1} parent=5 // pred_fallthru
        _
      %p185 = scmp.lt.s32.totalorder %s16, 2
      // Predicated region
      $region21: #{tpu_custom_call.1} parent=5 // pred_check
        %p186 = pneg %p185
      $region22: #{tpu_custom_call.1} parent=5 // pred_check_branch
        %188 = sbr.rel (%p186) target = $region24
      $region23: #{tpu_custom_call.1} parent=5 // pred_region
        // Predicated region
        $region25: #{tpu_custom_call.1} parent=23 // pred_check
          %p189 = pneg %p50
        $region26: #{tpu_custom_call.1} parent=23 // pred_check_branch
          %191 = sbr.rel (%p189) target = $region28
        $region27: #{tpu_custom_call.1} parent=23 // pred_region
          %s192 = sand.u32 %s40, 1
          %s193 = scalar_lea.sflag [#allocation3], %s192
          %s194 = sand.u32 %s40, 1
          %s195 = smul.addr %s194, 64
          %s196 = scalar_lea.vmem [#allocation2], %s195
          %s197 = smul.u32 8, %s23
          %199 = vsyncadd %s193, 0
          %s200 = smul.addr %s24, 8
          %s201 = sadd.s32 %s197, %s200
          %s202 = smul.addr %s201, 8
          %s203 = scalar_lea.hbm %s0, %s202
          %s204 = sshll.u32 %s203, 4
          %s205 = int_to_ptr.hbm [resolvable:$true] %s204
          %s206 = sshll.u32 %s196, 4
          %s207 = int_to_ptr.vmem [resolvable:$true] %s206
          %212 = dma.hbm_to_vmem [thread:$0]  %s205, 1024, %s207, %s193, 128, 128, 8
        $region28: #{tpu_custom_call.1} parent=23 // pred_fallthru
          _
      $region24: #{tpu_custom_call.1} parent=5 // pred_fallthru
        _
      %p213 = scmp.le.s32.totalorder 1, %s16
      %p214 = scmp.lt.s32.totalorder %s16, 3
      %p215 = pnand %p213, %p214
      %p216 = pneg %p215
      // Predicated region
      $region29: #{tpu_custom_call.1} parent=5 // pred_check
        _
      $region30: #{tpu_custom_call.1} parent=5 // pred_check_branch
        %218 = sbr.rel (%p215) target = $region32
      $region31: #{tpu_custom_call.1} parent=5 // pred_region
        %s219 = ssub.s32 %s16, 1
        %s220 = sand.u32 %s43, 1
        %s221 = scalar_lea.sflag [#allocation3], %s220
        %s222 = sand.u32 %s43, 1
        %s223 = smul.addr %s222, 64
        %s224 = scalar_lea.vmem [#allocation2], %s223
        // Predicated region
        $region33: #{tpu_custom_call.1} parent=31 // pred_check
          %p225 = pneg %p56
        $region34: #{tpu_custom_call.1} parent=31 // pred_check_branch
          %227 = sbr.rel (%p225) target = $region36
        $region35: #{tpu_custom_call.1} parent=31 // pred_region
          %229 = dma.done %s221, 1024
        $region36: #{tpu_custom_call.1} parent=31 // pred_fallthru
          _
        // Predicated region
        $region37: #{tpu_custom_call.1} parent=31 // pred_check
          %p230 = pneg %p82
        $region38: #{tpu_custom_call.1} parent=31 // pred_check_branch
          %232 = sbr.rel (%p230) target = $region40
        $region39: #{tpu_custom_call.1} parent=31 // pred_region
          %234 = dma.done [#allocation6], 1024
        $region40: #{tpu_custom_call.1} parent=31 // pred_fallthru
          _
        // Predicated region
        $region41: #{tpu_custom_call.1} parent=31 // pred_check
          %p235 = pneg %p108
        $region42: #{tpu_custom_call.1} parent=31 // pred_check_branch
          %237 = sbr.rel (%p235) target = $region44
        $region43: #{tpu_custom_call.1} parent=31 // pred_region
          %239 = dma.done [#allocation6], 1024
        $region44: #{tpu_custom_call.1} parent=31 // pred_fallthru
          _
        %s240 = sand.u32 %s43, 1
        %s241 = scalar_lea.sflag [#allocation3], %s240
        %s242 = sand.u32 %s43, 1
        %s243 = smul.addr %s242, 64
        %s244 = scalar_lea.vmem [#allocation2], %s243
        %p245 = pneg %p56
        %p246 = pneg %p53
        %p247 = pneg %p82
        %p248 = pneg %p79
        %p249 = pneg %p108
        %p250 = pneg %p105
        %p251 = pneg %p136
        %p252 = pneg %p133
        %s253 = sand.u32 %s123, 1
        %s254 = scalar_lea.sflag [#allocation4], %s253
        %s255 = sand.u32 %s123, 1
        %s256 = smul.addr %s255, 64
        %s257 = scalar_lea.vmem [#allocation8], %s256
        %s258 = smul.u32 8, %s25
        %s259 = smul.u32 8, %s25
        %s260 = smul.u32 8, %s25
        %s261 = smul.u32 8, %s25
        %v262 = vld [vmem:[%s224] sm:$0xff]
        %v263 = vld [vmem:[%s224 + $0x8] sm:$0xff]
        %v264 = vld [vmem:[%s224 + $0x10] sm:$0xff]
        %v265 = vld [vmem:[%s224 + $0x18] sm:$0xff]
        %v266 = vld [vmem:[%s224 + $0x20] sm:$0xff]
        %v267 = vld [vmem:[%s224 + $0x28] sm:$0xff]
        %v268 = vld [vmem:[%s224 + $0x30] sm:$0xff]
        %v269 = vld [vmem:[%s224 + $0x38] sm:$0xff]
        %270 = vrot.lane.b32.xlu0 %v262, 127
        %v271 = vpop.permute.xlu0 %270
        %272 = vrot.lane.b32.xlu0 %v263, 127
        %v273 = vpop.permute.xlu0 %272
        %274 = vrot.lane.b32.xlu0 %v264, 127
        %v275 = vpop.permute.xlu0 %274
        %276 = vrot.lane.b32.xlu0 %v265, 127
        %v277 = vpop.permute.xlu0 %276
        %278 = vrot.lane.b32.xlu0 %v266, 127
        %v279 = vpop.permute.xlu0 %278
        %280 = vrot.lane.b32.xlu0 %v267, 127
        %v281 = vpop.permute.xlu0 %280
        %282 = vrot.lane.b32.xlu0 %v268, 127
        %v283 = vpop.permute.xlu0 %282
        %284 = vrot.lane.b32.xlu0 %v269, 127
        %v285 = vpop.permute.xlu0 %284
        %286 = vrot.lane.b32.xlu0 %v262, 1
        %v287 = vpop.permute.xlu0 %286
        %288 = vrot.lane.b32.xlu0 %v263, 1
        %v289 = vpop.permute.xlu0 %288
        %290 = vrot.lane.b32.xlu0 %v264, 1
        %v291 = vpop.permute.xlu0 %290
        %292 = vrot.lane.b32.xlu0 %v265, 1
        %v293 = vpop.permute.xlu0 %292
        %294 = vrot.lane.b32.xlu0 %v266, 1
        %v295 = vpop.permute.xlu0 %294
        %296 = vrot.lane.b32.xlu0 %v267, 1
        %v297 = vpop.permute.xlu0 %296
        %298 = vrot.lane.b32.xlu0 %v268, 1
        %v299 = vpop.permute.xlu0 %298
        %300 = vrot.lane.b32.xlu0 %v269, 1
        %v301 = vpop.permute.xlu0 %300
        %v302 = vlaneseq
        %v303 = vand.u32 %v302, 127
        %v304 = vand.u32 %v303, 1
        %vm305 = vcmp.eq.s32.totalorder %v304, 0
        %v306 = vsel %vm305, %v271, %v287
        %v307 = vsel %vm305, %v273, %v289
        %v308 = vsel %vm305, %v275, %v291
        %v309 = vsel %vm305, %v277, %v293
        %v310 = vsel %vm305, %v279, %v295
        %v311 = vsel %vm305, %v281, %v297
        %v312 = vsel %vm305, %v283, %v299
        %v313 = vsel %vm305, %v285, %v301
        %v314 = vld [vmem:[#allocation5] sm:$0xff]
        %v315 = vld [vmem:[#allocation5 + $0x8] sm:$0xff]
        %v316 = vld [vmem:[#allocation5 + $0x10] sm:$0xff]
        %v317 = vld [vmem:[#allocation5 + $0x18] sm:$0xff]
        %v318 = vld [vmem:[#allocation5 + $0x20] sm:$0xff]
        %v319 = vld [vmem:[#allocation5 + $0x28] sm:$0xff]
        %v320 = vld [vmem:[#allocation5 + $0x30] sm:$0xff]
        %v321 = vld [vmem:[#allocation5 + $0x38] sm:$0xff]
        %v322 = vmul.f32 %v262, %v314
        %v323 = vmul.f32 %v263, %v315
        %v324 = vmul.f32 %v264, %v316
        %v325 = vmul.f32 %v265, %v317
        %v326 = vmul.f32 %v266, %v318
        %v327 = vmul.f32 %v267, %v319
        %v328 = vmul.f32 %v268, %v320
        %v329 = vmul.f32 %v269, %v321
        %v330 = vld [vmem:[#allocation7] sm:$0xff]
        %v331 = vld [vmem:[#allocation7 + $0x8] sm:$0xff]
        %v332 = vld [vmem:[#allocation7 + $0x10] sm:$0xff]
        %v333 = vld [vmem:[#allocation7 + $0x18] sm:$0xff]
        %v334 = vld [vmem:[#allocation7 + $0x20] sm:$0xff]
        %v335 = vld [vmem:[#allocation7 + $0x28] sm:$0xff]
        %v336 = vld [vmem:[#allocation7 + $0x30] sm:$0xff]
        %v337 = vld [vmem:[#allocation7 + $0x38] sm:$0xff]
        %v338 = vmul.f32 %v306, %v330
        %v339 = vmul.f32 %v307, %v331
        %v340 = vmul.f32 %v308, %v332
        %v341 = vmul.f32 %v309, %v333
        %v342 = vmul.f32 %v310, %v334
        %v343 = vmul.f32 %v311, %v335
        %v344 = vmul.f32 %v312, %v336
        %v345 = vmul.f32 %v313, %v337
        %v346 = vadd.f32 %v322, %v338
        %v347 = vadd.f32 %v323, %v339
        %v348 = vadd.f32 %v324, %v340
        %v349 = vadd.f32 %v325, %v341
        %v350 = vadd.f32 %v326, %v342
        %v351 = vadd.f32 %v327, %v343
        %v352 = vadd.f32 %v328, %v344
        %v353 = vadd.f32 %v329, %v345
        %354 = vst [vmem:[%s257] sm:$0xff] %v346
        %355 = vst [vmem:[%s257 + $0x8] sm:$0xff] %v347
        %356 = vst [vmem:[%s257 + $0x10] sm:$0xff] %v348
        %357 = vst [vmem:[%s257 + $0x18] sm:$0xff] %v349
        %358 = vst [vmem:[%s257 + $0x20] sm:$0xff] %v350
        %359 = vst [vmem:[%s257 + $0x28] sm:$0xff] %v351
        %360 = vst [vmem:[%s257 + $0x30] sm:$0xff] %v352
        %361 = vst [vmem:[%s257 + $0x38] sm:$0xff] %v353
        %s362 = sand.u32 %s123, 1
        %s363 = scalar_lea.sflag [#allocation4], %s362
        %s364 = sand.u32 %s123, 1
        %s365 = smul.addr %s364, 64
        %s366 = scalar_lea.vmem [#allocation8], %s365
        // Predicated region
        $region45: #{tpu_custom_call.1} parent=31 // pred_check
          %p367 = pneg %p133
        $region46: #{tpu_custom_call.1} parent=31 // pred_check_branch
          %369 = sbr.rel (%p367) target = $region48
        $region47: #{tpu_custom_call.1} parent=31 // pred_region
          %s370 = smul.u32 8, %s25
          %372 = vsyncadd %s363, 0
          %s373 = smul.addr %s26, 8
          %s374 = sadd.s32 %s370, %s373
          %s375 = smul.addr %s374, 8
          %s376 = scalar_lea.hbm %s3, %s375
          %s377 = sshll.u32 %s366, 4
          %s378 = int_to_ptr.vmem [resolvable:$true] %s377
          %s379 = sshll.u32 %s376, 4
          %s380 = int_to_ptr.hbm [resolvable:$true] %s379
          %385 = dma.vmem_to_hbm [thread:$0]  %s378, 1024, %s380, %s363, 128, 128, 8
        $region48: #{tpu_custom_call.1} parent=31 // pred_fallthru
          _
      $region32: #{tpu_custom_call.1} parent=5 // pred_fallthru
        _
      %p386 = scmp.le.s32.totalorder 2, %s16
      // Predicated region
      $region49: #{tpu_custom_call.1} parent=5 // pred_check
        %p387 = pneg %p386
      $region50: #{tpu_custom_call.1} parent=5 // pred_check_branch
        %389 = sbr.rel (%p387) target = $region52
      $region51: #{tpu_custom_call.1} parent=5 // pred_region
        %s390 = ssub.s32 %s16, 2
        // Predicated region
        $region53: #{tpu_custom_call.1} parent=51 // pred_check
          %p391 = pneg %p139
        $region54: #{tpu_custom_call.1} parent=51 // pred_check_branch
          %393 = sbr.rel (%p391) target = $region56
        $region55: #{tpu_custom_call.1} parent=51 // pred_region
          %s394 = sand.u32 %s124, 1
          %s395 = scalar_lea.sflag [#allocation4], %s394
          %s396 = sand.u32 %s124, 1
          %s397 = smul.addr %s396, 64
          %s398 = scalar_lea.vmem [#allocation8], %s397
          %400 = dma.done %s395, 1024
        $region56: #{tpu_custom_call.1} parent=51 // pred_fallthru
          _
      $region52: #{tpu_custom_call.1} parent=5 // pred_fallthru
        _
    $region6: #{tpu_custom_call.1} parent=1 // loop_footer
      %s20 = sadd.s32 1, %s16
    $region7: #{tpu_custom_call.1} parent=1 // loop_footer_branch
      %15 = sbr.rel target = $region3
    $region8: #{tpu_custom_call.1} parent=1 // loop_exit
      _
    %401 = vsyncpa [#allocation3], 1
    %s402 = scalar_lea.sflag [#allocation3], 1
    %403 = vsyncpa %s402, 1
    %404 = vsyncpa [#allocation6], 1
    %405 = vsyncpa [#allocation4], 1
    %s406 = scalar_lea.sflag [#allocation4], 1
    %407 = vsyncpa %s406, 1

</llo_original>
